<compile_context>
chip_gen: v7x
topology: tpu7x:2x2x1
jax: 0.10.0
libtpu: 0.0.40
codegen_flags: <defaults>
</compile_context>

<pallas_src>
import jax
import jax.numpy as jnp
from jax.experimental import pallas as pl
from jax.experimental.pallas import tpu as pltpu


def _round_up(x, m):
    return ((x + m - 1) // m) * m


def _mlp_kernel(img_ref, cli_ref, w1i_ref, w1c_ref, shift_ref, w2_ref, b2_ref,
                out_ref):
    # Inputs arrive as f32 straight from HBM; cast to bf16 in-kernel so the
    # wrapper does no extra HBM passes.  MXU matmuls accumulate in f32.
    h = jnp.dot(img_ref[...].astype(jnp.bfloat16), w1i_ref[...],
                preferred_element_type=jnp.float32)
    h = h + jnp.dot(cli_ref[...].astype(jnp.bfloat16), w1c_ref[...],
                    preferred_element_type=jnp.float32)
    # BN scale (and Linear-1 bias) are pre-folded into w1 / shift: only the
    # additive shift remains.  ReLU in f32 on the VPU.
    h = jnp.maximum(h + shift_ref[...], 0.0)
    # Output head: bf16 MXU matmul, f32 accumulate + bias, cast on the store.
    risk = jnp.dot(h.astype(jnp.bfloat16), w2_ref[...],
                   preferred_element_type=jnp.float32) + b2_ref[...]
    out_ref[...] = risk.astype(out_ref.dtype)


def mlp_forward(feat_img, cli_data, params, *, block_b=1024,
                out_dtype=jnp.bfloat16, trim_classes=True):
    """Fused MLP forward. feat_img: (B, indims_img) f32, cli_data: (B, indims_cli) f32."""
    w1 = params["w1"].astype(jnp.float32)      # (D_img + D_cli, H), pre-transposed
    b1 = params["b1"].astype(jnp.float32)      # (H,)
    gamma = params["bn_gamma"].astype(jnp.float32)
    beta = params["bn_beta"].astype(jnp.float32)
    mean = params["bn_mean"].astype(jnp.float32)
    var = params["bn_var"].astype(jnp.float32)
    eps = params["bn_eps"]
    w2 = params["w2"].astype(jnp.float32)      # (H, C)
    b2 = params["b2"].astype(jnp.float32)      # (C,)

    B, D_img = feat_img.shape
    D_cli = cli_data.shape[1]
    H = w1.shape[1]
    C = w2.shape[1]

    LANE = 128
    SUB = 16                      # satisfies both f32 (8) and bf16 (16) sublane packing
    C_pad = _round_up(C, LANE)    # 400 -> 512: lane-dense (unmasked) output stores

    # Batch tiling: no wrapper-side batch padding (ragged final block), tiles
    # large enough to amortize the ~0.35 us per-step overhead, and >=2 grid
    # steps for modest B so v7x's two TensorCores both get work.
    if B >= 2 * block_b:
        TB = block_b
    elif B >= 4 * SUB:
        TB = _round_up(-(-B // 2), SUB)     # ~half the batch -> grid of 2
    else:
        TB = B                              # single tile == full batch dim (legal block)
    grid_b = pl.cdiv(B, TB)

    # Fold Linear-1 bias + BatchNorm (inference stats) into the weights (f32,
    # done once on the host / constant-foldable):
    #   BN(x @ W1 + b1) = x @ (W1 * scale) + shift
    scale = gamma * jax.lax.rsqrt(var + eps)             # (H,)
    shift = (beta + scale * (b1 - mean)).reshape(1, H)   # f32, used in-kernel
    w1_img = (w1[:D_img] * scale[None, :]).astype(jnp.bfloat16)   # (D_img, H)
    w1_cli = (w1[D_img:] * scale[None, :]).astype(jnp.bfloat16)   # (D_cli, H), no pad
    w2_p = jnp.pad(w2, ((0, 0), (0, C_pad - C))).astype(jnp.bfloat16)   # (H, C_pad)
    b2_p = jnp.pad(b2, (0, C_pad - C)).reshape(1, C_pad)                # f32

    # VMEM working set: double-buffered input/output tiles + resident weights.
    in_bytes = jnp.dtype(feat_img.dtype).itemsize
    out_bytes = jnp.dtype(out_dtype).itemsize
    vmem_need = (
        2 * TB * (D_img + D_cli) * in_bytes         # input tiles, 2 buffers
        + 2 * TB * C_pad * out_bytes                # output tiles, 2 buffers
        + ((D_img + D_cli) * H + H * C_pad) * 2     # resident bf16 weights
        + (H + C_pad) * 4                           # shift / b2 (f32)
    )
    vmem_limit = int(min(max(2 * vmem_need, 4 << 20), 32 << 20))

    out = pl.pallas_call(
        _mlp_kernel,
        out_shape=jax.ShapeDtypeStruct((B, C_pad), out_dtype),
        grid=(grid_b,),
        in_specs=[
            pl.BlockSpec((TB, D_img), lambda i: (i, 0)),   # img tile (f32)
            pl.BlockSpec((TB, D_cli), lambda i: (i, 0)),   # cli tile (f32, full 24-wide)
            pl.BlockSpec((D_img, H), lambda i: (0, 0)),    # w1_img (resident)
            pl.BlockSpec((D_cli, H), lambda i: (0, 0)),    # w1_cli (resident)
            pl.BlockSpec((1, H), lambda i: (0, 0)),        # folded BN/bias shift
            pl.BlockSpec((H, C_pad), lambda i: (0, 0)),    # w2 (resident)
            pl.BlockSpec((1, C_pad), lambda i: (0, 0)),    # b2
        ],
        out_specs=pl.BlockSpec((TB, C_pad), lambda i: (i, 0)),
        compiler_params=pltpu.CompilerParams(
            dimension_semantics=("parallel",),
            vmem_limit_bytes=vmem_limit,
        ),
    )(feat_img, cli_data, w1_img, w1_cli, shift, w2_p, b2_p)

    # No batch padding was added, so only the padded class columns need
    # stripping; consumers that tolerate a 512-wide padded slab (and want to
    # avoid the slice-copy pass over the output) can pass trim_classes=False.
    return out[:, :C] if trim_classes else out


def init_params(key, indims_img=128, indims_cli=24, dims=128, n_classes=400):
    """Deterministic synthetic parameters matching the PyTorch module's shapes."""
    d_in = indims_img + indims_cli
    k1, k2, k3, k4 = jax.random.split(key, 4)
    # nn.Linear default init: U(-1/sqrt(fan_in), 1/sqrt(fan_in))
    lim1 = 1.0 / jnp.sqrt(jnp.float32(d_in))
    lim2 = 1.0 / jnp.sqrt(jnp.float32(dims))
    return {
        # stored pre-transposed: (in_features, out_features)
        "w1": jax.random.uniform(k1, (d_in, dims), jnp.float32, -lim1, lim1),
        "b1": jax.random.uniform(k2, (dims,), jnp.float32, -lim1, lim1),
        "bn_gamma": jnp.ones((dims,), jnp.float32),
        "bn_beta": jnp.zeros((dims,), jnp.float32),
        "bn_mean": jnp.zeros((dims,), jnp.float32),
        "bn_var": jnp.ones((dims,), jnp.float32),
        "bn_eps": jnp.float32(1e-5),
        "w2": jax.random.uniform(k3, (dims, n_classes), jnp.float32, -lim2, lim2),
        "b2": jax.random.uniform(k4, (n_classes,), jnp.float32, -lim2, lim2),
    }


if __name__ == "__main__":
    # Module-consistent small shapes: batch=8, img-feat=128, clinical=24,
    # hidden=128, n_classes=400 (the module's defaults).
    B, indims_img, indims_cli, dims, n_classes = 8, 128, 24, 128, 400

    key = jax.random.PRNGKey(0)
    k_img, k_cli, k_params = jax.random.split(key, 3)

    feat_img = jax.random.normal(k_img, (B, indims_img), jnp.float32)
    cli_data = jax.random.normal(k_cli, (B, indims_cli), jnp.float32)
    params = init_params(k_params, indims_img, indims_cli, dims, n_classes)

    risk = mlp_forward(feat_img, cli_data, params)
    risk = jax.block_until_ready(risk)

    # Pure-JAX f32 reference (eval-mode semantics). bf16 MXU matmuls plus the
    # bf16 output store imply a looser tolerance than an all-f32 version.
    x = jnp.concatenate([feat_img, cli_data], axis=1)
    h = x @ params["w1"] + params["b1"]
    h = (h - params["bn_mean"]) / jnp.sqrt(params["bn_var"] + params["bn_eps"])
    h = h * params["bn_gamma"] + params["bn_beta"]
    h = jnp.maximum(h, 0.0)
    ref = h @ params["w2"] + params["b2"]

    risk_f32 = risk.astype(jnp.float32)
    assert risk.shape == (B, n_classes)
    assert jnp.allclose(risk_f32, ref, atol=5e-2, rtol=5e-2), float(
        jnp.max(jnp.abs(risk_f32 - ref)))

    print("KERNEL_OK")
</pallas_src>

<mosaic_0001>
module attributes {stable_mosaic.version = 11 : i64} {
  func.func @_mlp_kernel(%arg0: i32, %arg1: memref<8x128xf32, #tpu.memory_space<vmem>>, %arg2: memref<8x24xf32, #tpu.memory_space<vmem>>, %arg3: memref<128x128xbf16, #tpu.memory_space<vmem>>, %arg4: memref<24x128xbf16, #tpu.memory_space<vmem>>, %arg5: memref<1x128xf32, #tpu.memory_space<vmem>>, %arg6: memref<128x512xbf16, #tpu.memory_space<vmem>>, %arg7: memref<1x512xf32, #tpu.memory_space<vmem>>, %arg8: memref<8x512xbf16, #tpu.memory_space<vmem>>) attributes {dimension_semantics = [#tpu.dimension_semantics<parallel>], iteration_bounds = array<i64: 1>, scalar_prefetch = 0 : i64, scratch_operands = 0 : i64, tpu.core_type = #tpu.core_type<tc>, window_params = [{transform_indices = @transform_0, window_bounds = array<i64: 8, 128>}, {transform_indices = @transform_1, window_bounds = array<i64: 8, 24>}, {pipeline_mode = #tpu.pipeline_mode<synchronous>, transform_indices = @transform_2, window_bounds = array<i64: 128, 128>}, {pipeline_mode = #tpu.pipeline_mode<synchronous>, transform_indices = @transform_3, window_bounds = array<i64: 24, 128>}, {pipeline_mode = #tpu.pipeline_mode<synchronous>, transform_indices = @transform_4, window_bounds = array<i64: 1, 128>}, {pipeline_mode = #tpu.pipeline_mode<synchronous>, transform_indices = @transform_5, window_bounds = array<i64: 128, 512>}, {pipeline_mode = #tpu.pipeline_mode<synchronous>, transform_indices = @transform_6, window_bounds = array<i64: 1, 512>}, {transform_indices = @transform_7, window_bounds = array<i64: 8, 512>}]} {
    %c0 = arith.constant 0 : index
    %c0_0 = arith.constant 0 : index
    %0 = vector.load %arg1[%c0, %c0_0] : memref<8x128xf32, #tpu.memory_space<vmem>>, vector<8x128xf32>
    %1 = arith.truncf %0 : vector<8x128xf32> to vector<8x128xbf16>
    %c0_1 = arith.constant 0 : index
    %c0_2 = arith.constant 0 : index
    %2 = vector.load %arg3[%c0_1, %c0_2] : memref<128x128xbf16, #tpu.memory_space<vmem>>, vector<128x128xbf16>
    %cst = arith.constant dense<0.000000e+00> : vector<8x128xf32>
    %3 = tpu.matmul %1, %2, %cst {dimension_numbers = #tpu.dot_dimension_numbers<[1], [0], [0], [1], [0, 0, 1, 1], [], []>} : vector<8x128xbf16>, vector<128x128xbf16>, vector<8x128xf32> -> vector<8x128xf32>
    %c0_3 = arith.constant 0 : index
    %c0_4 = arith.constant 0 : index
    %4 = vector.load %arg2[%c0_3, %c0_4] : memref<8x24xf32, #tpu.memory_space<vmem>>, vector<8x24xf32>
    %5 = arith.truncf %4 : vector<8x24xf32> to vector<8x24xbf16>
    %c0_5 = arith.constant 0 : index
    %c0_6 = arith.constant 0 : index
    %6 = vector.load %arg4[%c0_5, %c0_6] : memref<24x128xbf16, #tpu.memory_space<vmem>>, vector<24x128xbf16>
    %cst_7 = arith.constant dense<0.000000e+00> : vector<8x128xf32>
    %7 = tpu.matmul %5, %6, %cst_7 {dimension_numbers = #tpu.dot_dimension_numbers<[1], [0], [0], [1], [0, 0, 1, 1], [], []>} : vector<8x24xbf16>, vector<24x128xbf16>, vector<8x128xf32> -> vector<8x128xf32>
    %8 = arith.addf %3, %7 : vector<8x128xf32>
    %c0_8 = arith.constant 0 : index
    %c0_9 = arith.constant 0 : index
    %9 = vector.load %arg5[%c0_8, %c0_9] : memref<1x128xf32, #tpu.memory_space<vmem>>, vector<1x128xf32>
    %10 = vector.broadcast %9 : vector<1x128xf32> to vector<8x128xf32>
    %11 = arith.addf %8, %10 : vector<8x128xf32>
    %cst_10 = arith.constant 0.000000e+00 : f32
    %12 = vector.broadcast %cst_10 : f32 to vector<8x128xf32>
    %13 = arith.maximumf %11, %12 : vector<8x128xf32>
    %14 = arith.truncf %13 : vector<8x128xf32> to vector<8x128xbf16>
    %c0_11 = arith.constant 0 : index
    %c0_12 = arith.constant 0 : index
    %15 = vector.load %arg6[%c0_11, %c0_12] : memref<128x512xbf16, #tpu.memory_space<vmem>>, vector<128x512xbf16>
    %cst_13 = arith.constant dense<0.000000e+00> : vector<8x512xf32>
    %16 = tpu.matmul %14, %15, %cst_13 {dimension_numbers = #tpu.dot_dimension_numbers<[1], [0], [0], [1], [0, 0, 1, 1], [], []>} : vector<8x128xbf16>, vector<128x512xbf16>, vector<8x512xf32> -> vector<8x512xf32>
    %c0_14 = arith.constant 0 : index
    %c0_15 = arith.constant 0 : index
    %17 = vector.load %arg7[%c0_14, %c0_15] : memref<1x512xf32, #tpu.memory_space<vmem>>, vector<1x512xf32>
    %18 = vector.broadcast %17 : vector<1x512xf32> to vector<8x512xf32>
    %19 = arith.addf %16, %18 : vector<8x512xf32>
    %20 = arith.truncf %19 : vector<8x512xf32> to vector<8x512xbf16>
    %c0_16 = arith.constant 0 : index
    %c0_17 = arith.constant 0 : index
    %21 = vector.load %arg8[%c0_16, %c0_17] : memref<8x512xbf16, #tpu.memory_space<vmem>>, vector<8x512xbf16>
    tpu.vector_store %arg8[%c0_16, %c0_17], %20 {strides = array<i32>} : memref<8x512xbf16, #tpu.memory_space<vmem>>, vector<8x512xbf16>,
    return
  }
  func.func @transform_0(%arg0: i32) -> (i32, i32) {
    %c0_i32 = arith.constant 0 : i32
    %c0_i32_0 = arith.constant 0 : i32
    return %arg0, %c0_i32 : i32, i32
  }
  func.func @transform_1(%arg0: i32) -> (i32, i32) {
    %c0_i32 = arith.constant 0 : i32
    %c0_i32_0 = arith.constant 0 : i32
    return %arg0, %c0_i32 : i32, i32
  }
  func.func @transform_2(%arg0: i32) -> (i32, i32) {
    %c0_i32 = arith.constant 0 : i32
    %c0_i32_0 = arith.constant 0 : i32
    %c0_i32_1 = arith.constant 0 : i32
    return %c0_i32, %c0_i32_0 : i32, i32
  }
  func.func @transform_3(%arg0: i32) -> (i32, i32) {
    %c0_i32 = arith.constant 0 : i32
    %c0_i32_0 = arith.constant 0 : i32
    %c0_i32_1 = arith.constant 0 : i32
    return %c0_i32, %c0_i32_0 : i32, i32
  }
  func.func @transform_4(%arg0: i32) -> (i32, i32) {
    %c0_i32 = arith.constant 0 : i32
    %c0_i32_0 = arith.constant 0 : i32
    %c0_i32_1 = arith.constant 0 : i32
    return %c0_i32, %c0_i32_0 : i32, i32
  }
  func.func @transform_5(%arg0: i32) -> (i32, i32) {
    %c0_i32 = arith.constant 0 : i32
    %c0_i32_0 = arith.constant 0 : i32
    %c0_i32_1 = arith.constant 0 : i32
    return %c0_i32, %c0_i32_0 : i32, i32
  }
  func.func @transform_6(%arg0: i32) -> (i32, i32) {
    %c0_i32 = arith.constant 0 : i32
    %c0_i32_0 = arith.constant 0 : i32
    %c0_i32_1 = arith.constant 0 : i32
    return %c0_i32, %c0_i32_0 : i32, i32
  }
  func.func @transform_7(%arg0: i32) -> (i32, i32) {
    %c0_i32 = arith.constant 0 : i32
    %c0_i32_0 = arith.constant 0 : i32
    return %arg0, %c0_i32 : i32, i32
  }
}

</mosaic_0001>

<llo_original>
// kernel: tpu_custom_call.1
$region0: #{tpu_custom_call.1}
  #allocation0 [shape = 'u32[]', space=smem, size = 0x4, offset = 0x4, fixed_abs, tag = 'smem constant byte address 0x4 - core index']
  #allocation1 [shape = 'u32[144,128]{1,0:T(1,128)}', space=vmem, size = 0x12000, scoped, tag = 'internal scratch']
  %s0 = inlined_call_operand.hbm [shape: f32[8,128], index: 0, kind: input, shape index: {}]
  %s1 = inlined_call_operand.hbm [shape: f32[8,24], index: 1, kind: input, shape index: {}]
  %s2 = inlined_call_operand.hbm [shape: bf16[128,128], index: 2, kind: input, shape index: {}]
  %s3 = inlined_call_operand.hbm [shape: bf16[24,128], index: 3, kind: input, shape index: {}]
  %s4 = inlined_call_operand.vmem [shape: f32[1,128], index: 4, kind: input, shape index: {}]
  %s5 = inlined_call_operand.hbm [shape: bf16[128,512], index: 5, kind: input, shape index: {}]
  %s6 = inlined_call_operand.vmem [shape: f32[1,512], index: 6, kind: input, shape index: {}]
  %s7 = inlined_call_operand.hbm [shape: bf16[8,512], index: 7, kind: output, shape index: {}]
  %s8 = sld [smem:[#allocation0]]
  $region58: #{tpu_custom_call.1} parent=0
    _
  %s10 = ssub.s32 1, %s8
  %s11 = scalar_select 0, %s10, %s8
  $region1: #{tpu_custom_call.1} parent=0
    #allocation2 [shape = 'u8[4096]{0}', space=vmem, size = 0x1000, scoped, tag = 'input window, operand 0, single buffered']
    #allocation3 [shape = 's32[1]{0}', space=sflag, size = 0x4, scoped, tag = 'scoped memory for tpu_custom_call.1']
    #allocation4 [shape = 's32[1]{0}', space=sflag, size = 0x4, scoped, tag = 'scoped memory for tpu_custom_call.1']
    #allocation5 [shape = 'u8[4096]{0}', space=vmem, size = 0x1000, scoped, tag = 'input window, operand 1, single buffered']
    #allocation6 [shape = 's32[1]{0}', space=sflag, size = 0x4, scoped, tag = 'scoped memory for tpu_custom_call.1']
    #allocation7 [shape = 'u8[32768]{0}', space=vmem, size = 0x8000, scoped, tag = 'input window, operand 2, single buffered']
    #allocation8 [shape = 'u8[6144]{0}', space=vmem, size = 0x1800, scoped, tag = 'input window, operand 3, single buffered']
    #allocation9 [shape = 's32[1]{0}', space=sflag, size = 0x4, scoped, tag = 'scoped memory for tpu_custom_call.1']
    #allocation10 [shape = 'u8[131072]{0}', space=vmem, size = 0x20000, scoped, tag = 'input window, operand 5, single buffered']
    #allocation11 [shape = 'u8[8192]{0}', space=vmem, size = 0x2000, scoped, tag = 'output window, operand 0, single buffered']
    %12 = vsyncpa [#allocation3], 0
    %13 = vsyncpa [#allocation6], 0
    %14 = vsyncpa [#allocation9], 0
    %15 = vsyncpa [#allocation4], 0
    // Predicated region
    $region2: #{tpu_custom_call.1} parent=1 // pred_check
      _
    $region3: #{tpu_custom_call.1} parent=1 // pred_check_branch
      %17 = sbr.rel (0) target = $region5
    $region4: #{tpu_custom_call.1} parent=1 // pred_region
      %s19 = ssub.s32 128, 128
      %20 = vsyncadd [#allocation3], %s19
      %s22 = sshll.u32 [#allocation2], 4
      %s23 = int_to_ptr.vmem [resolvable:$true] %s22
      %25 = dma.hbm_to_vmem [thread:$0]  %s0, 128, %s23, [#allocation3]
    $region5: #{tpu_custom_call.1} parent=1 // pred_fallthru
      _
    // Predicated region
    $region6: #{tpu_custom_call.1} parent=1 // pred_check
      _
    $region7: #{tpu_custom_call.1} parent=1 // pred_check_branch
      %27 = sbr.rel (0) target = $region9
    $region8: #{tpu_custom_call.1} parent=1 // pred_region
      %s29 = ssub.s32 128, 128
      %30 = vsyncadd [#allocation6], %s29
      %s32 = sshll.u32 [#allocation5], 4
      %s33 = int_to_ptr.vmem [resolvable:$true] %s32
      %35 = dma.hbm_to_vmem [thread:$0]  %s1, 128, %s33, [#allocation6]
    $region9: #{tpu_custom_call.1} parent=1 // pred_fallthru
      _
    // Predicated region
    $region10: #{tpu_custom_call.1} parent=1 // pred_check
      _
    $region11: #{tpu_custom_call.1} parent=1 // pred_check_branch
      %37 = sbr.rel (0) target = $region13
    $region12: #{tpu_custom_call.1} parent=1 // pred_region
      %s39 = ssub.s32 1024, 1024
      %40 = vsyncadd [#allocation6], %s39
      %s41 = sshll.u32 [#allocation7], 4
      %s42 = int_to_ptr.vmem [resolvable:$true] %s41
      %47 = dma.hbm_to_vmem [thread:$0]  %s2, 1024, %s42, [#allocation6], 64, 64, 4
    $region13: #{tpu_custom_call.1} parent=1 // pred_fallthru
      _
    // Predicated region
    $region14: #{tpu_custom_call.1} parent=1 // pred_check
      _
    $region15: #{tpu_custom_call.1} parent=1 // pred_check_branch
      %49 = sbr.rel (0) target = $region17
    $region16: #{tpu_custom_call.1} parent=1 // pred_region
      %s51 = ssub.s32 192, 192
      %52 = vsyncadd [#allocation9], %s51
      %s53 = sshll.u32 [#allocation8], 4
      %s54 = int_to_ptr.vmem [resolvable:$true] %s53
      %59 = dma.hbm_to_vmem [thread:$0]  %s3, 192, %s54, [#allocation9], 64, 64, 4
    $region17: #{tpu_custom_call.1} parent=1 // pred_fallthru
      _
    // Predicated region
    $region18: #{tpu_custom_call.1} parent=1 // pred_check
      _
    $region19: #{tpu_custom_call.1} parent=1 // pred_check_branch
      %61 = sbr.rel (0) target = $region21
    $region20: #{tpu_custom_call.1} parent=1 // pred_region
      _
    $region21: #{tpu_custom_call.1} parent=1 // pred_fallthru
      _
    // Predicated region
    $region22: #{tpu_custom_call.1} parent=1 // pred_check
      _
    $region23: #{tpu_custom_call.1} parent=1 // pred_check_branch
      %63 = sbr.rel (0) target = $region25
    $region24: #{tpu_custom_call.1} parent=1 // pred_region
      %s65 = ssub.s32 4096, 4096
      %66 = vsyncadd [#allocation9], %s65
      %s67 = sshll.u32 [#allocation10], 4
      %s68 = int_to_ptr.vmem [resolvable:$true] %s67
      %73 = dma.hbm_to_vmem [thread:$0]  %s5, 4096, %s68, [#allocation9], 256, 256, 16
    $region25: #{tpu_custom_call.1} parent=1 // pred_fallthru
      _
    // Predicated region
    $region26: #{tpu_custom_call.1} parent=1 // pred_check
      _
    $region27: #{tpu_custom_call.1} parent=1 // pred_check_branch
      %75 = sbr.rel (0) target = $region29
    $region28: #{tpu_custom_call.1} parent=1 // pred_region
      _
    $region29: #{tpu_custom_call.1} parent=1 // pred_fallthru
      _
    // Predicated region
    $region30: #{tpu_custom_call.1} parent=1 // pred_check
      _
    $region31: #{tpu_custom_call.1} parent=1 // pred_check_branch
      %77 = sbr.rel (0) target = $region33
    $region32: #{tpu_custom_call.1} parent=1 // pred_region
      %78 = dma.done [#allocation3], 128
    $region33: #{tpu_custom_call.1} parent=1 // pred_fallthru
      _
    // Predicated region
    $region34: #{tpu_custom_call.1} parent=1 // pred_check
      _
    $region35: #{tpu_custom_call.1} parent=1 // pred_check_branch
      %80 = sbr.rel (0) target = $region37
    $region36: #{tpu_custom_call.1} parent=1 // pred_region
      %81 = dma.done [#allocation6], 128
    $region37: #{tpu_custom_call.1} parent=1 // pred_fallthru
      _
    // Predicated region
    $region38: #{tpu_custom_call.1} parent=1 // pred_check
      _
    $region39: #{tpu_custom_call.1} parent=1 // pred_check_branch
      %83 = sbr.rel (0) target = $region41
    $region40: #{tpu_custom_call.1} parent=1 // pred_region
      %84 = dma.done [#allocation6], 1024
    $region41: #{tpu_custom_call.1} parent=1 // pred_fallthru
      _
    // Predicated region
    $region42: #{tpu_custom_call.1} parent=1 // pred_check
      _
    $region43: #{tpu_custom_call.1} parent=1 // pred_check_branch
      %86 = sbr.rel (0) target = $region45
    $region44: #{tpu_custom_call.1} parent=1 // pred_region
      %87 = dma.done [#allocation9], 192
    $region45: #{tpu_custom_call.1} parent=1 // pred_fallthru
      _
    // Predicated region
    $region46: #{tpu_custom_call.1} parent=1 // pred_check
      _
    $region47: #{tpu_custom_call.1} parent=1 // pred_check_branch
      %89 = sbr.rel (0) target = $region49
    $region48: #{tpu_custom_call.1} parent=1 // pred_region
      %90 = dma.done [#allocation9], 4096
    $region49: #{tpu_custom_call.1} parent=1 // pred_fallthru
      _
    %v92 = vld [vmem:[#allocation2] sm:$0xff]
    %v93 = vpack.c.bf16 %v92, %v92
    %v94 = vld [vmem:[#allocation7] sm:$0xf]
    %v95 = vld [vmem:[#allocation7 + $0x4] sm:$0xf]
    %v96 = vld [vmem:[#allocation7 + $0x8] sm:$0xf]
    %v97 = vld [vmem:[#allocation7 + $0xc] sm:$0xf]
    %v98 = vld [vmem:[#allocation7 + $0x10] sm:$0xf]
    %v99 = vld [vmem:[#allocation7 + $0x14] sm:$0xf]
    %v100 = vld [vmem:[#allocation7 + $0x18] sm:$0xf]
    %v101 = vld [vmem:[#allocation7 + $0x1c] sm:$0xf]
    %v102 = vld [vmem:[#allocation7 + $0x20] sm:$0xf]
    %v103 = vld [vmem:[#allocation7 + $0x24] sm:$0xf]
    %v104 = vld [vmem:[#allocation7 + $0x28] sm:$0xf]
    %v105 = vld [vmem:[#allocation7 + $0x2c] sm:$0xf]
    %v106 = vld [vmem:[#allocation7 + $0x30] sm:$0xf]
    %v107 = vld [vmem:[#allocation7 + $0x34] sm:$0xf]
    %v108 = vld [vmem:[#allocation7 + $0x38] sm:$0xf]
    %v109 = vld [vmem:[#allocation7 + $0x3c] sm:$0xf]
    %v110 = vld [vmem:[#allocation5] sm:$0xff]
    %v111 = vpack.c.bf16 %v110, %v110
    %v112 = vld [vmem:[#allocation8] sm:$0xf]
    %v113 = vld [vmem:[#allocation8 + $0x4] sm:$0xf]
    %v114 = vld [vmem:[#allocation8 + $0x8] sm:$0xf]
    %v118 = vunpack.c.l.b16 %v112
    %v119 = vunpack.c.l.b16 %v113
    %v120 = vunpack.c.l.b16 %v114
    %v121 = vpack.c.b16 %v119, %v118
    %v122 = vpack.c.b16 %v120, %v120
    %vm124 = vcmask 195584
    %v126 = vsel %vm124, %v111, 0
    %vm128 = vcmask 1043456
    %v130 = vsel %vm128, %v122, 0
    %132 = vmatprep.subr.bf16.mxu0 0
    %133 = vmatpush1.bf16.msra.mxu0 %v121
    %134 = vmatprep.subr.bf16.mxu0 0
    %135 = vmatpush1.bf16.msra.mxu0 %v130
    %136 = vmatprep.subr.bf16.mxu0 0
    %137 = vmatpush1.bf16.msra.mxu0 0
    %138 = vmatprep.subr.bf16.mxu0 0
    %139 = vmatpush1.bf16.msra.mxu0 0
    %140 = vmatprep.subr.bf16.mxu0 0
    %141 = vmatpush1.bf16.msra.mxu0 0
    %142 = vmatprep.subr.bf16.mxu0 0
    %143 = vmatpush1.bf16.msra.mxu0 0
    %144 = vmatprep.subr.bf16.mxu0 0
    %145 = vmatpush1.bf16.msra.mxu0 0
    %146 = vmatprep.subr.bf16.mxu0 0
    %147 = vmatpush1.bf16.msra.mxu0 0
    %148 = vmatprep.subr.bf16.mxu0 0
    %149 = vmatpush1.bf16.msra.mxu0 0
    %150 = vmatprep.subr.bf16.mxu0 0
    %151 = vmatpush1.bf16.msra.mxu0 0
    %152 = vmatprep.subr.bf16.mxu0 0
    %153 = vmatpush1.bf16.msra.mxu0 0
    %154 = vmatprep.subr.bf16.mxu0 0
    %155 = vmatpush1.bf16.msra.mxu0 0
    %156 = vmatprep.subr.bf16.mxu0 0
    %157 = vmatpush1.bf16.msra.mxu0 0
    %158 = vmatprep.subr.bf16.mxu0 0
    %159 = vmatpush1.bf16.msra.mxu0 0
    %160 = vmatprep.subr.bf16.mxu0 0
    %161 = vmatpush1.bf16.msra.mxu0 0
    %162 = vmatprep.subr.bf16.mxu0 0
    %163 = vmatpush1.bf16.msra.mxu0 0
    %164 = vmatprep.mubr.bf16.mxu0 0
    %165 = vmatmul.mubr.bf16.gmra.mrb[0].mxu0 %v126
    %v166 = vpop.f32.mrb[0].mxu0
    %v167 = vadd.f32 0.0, %v166
    %v168 = vpop.f32.mrb[0].mxu0
    %v169 = vpop.f32.mrb[0].mxu0
    %v170 = vpop.f32.mrb[0].mxu0
    %171 = vdwg.mxu0
    %v188 = vunpack.c.l.b16 %v94
    %v189 = vunpack.c.l.b16 %v95
    %v190 = vunpack.c.l.b16 %v96
    %v191 = vunpack.c.l.b16 %v97
    %v192 = vunpack.c.l.b16 %v98
    %v193 = vunpack.c.l.b16 %v99
    %v194 = vunpack.c.l.b16 %v100
    %v195 = vunpack.c.l.b16 %v101
    %v196 = vunpack.c.l.b16 %v102
    %v197 = vunpack.c.l.b16 %v103
    %v198 = vunpack.c.l.b16 %v104
    %v199 = vunpack.c.l.b16 %v105
    %v200 = vunpack.c.l.b16 %v106
    %v201 = vunpack.c.l.b16 %v107
    %v202 = vunpack.c.l.b16 %v108
    %v203 = vunpack.c.l.b16 %v109
    %v204 = vpack.c.b16 %v189, %v188
    %v205 = vpack.c.b16 %v191, %v190
    %v206 = vpack.c.b16 %v193, %v192
    %v207 = vpack.c.b16 %v195, %v194
    %v208 = vpack.c.b16 %v197, %v196
    %v209 = vpack.c.b16 %v199, %v198
    %v210 = vpack.c.b16 %v201, %v200
    %v211 = vpack.c.b16 %v203, %v202
    %220 = vmatprep.subr.bf16.mxu0 0
    %221 = vmatpush1.bf16.msra.mxu0 %v204
    %222 = vmatprep.subr.bf16.mxu0 0
    %223 = vmatpush1.bf16.msra.mxu0 %v205
    %224 = vmatprep.subr.bf16.mxu0 0
    %225 = vmatpush1.bf16.msra.mxu0 %v206
    %226 = vmatprep.subr.bf16.mxu0 0
    %227 = vmatpush1.bf16.msra.mxu0 %v207
    %228 = vmatprep.subr.bf16.mxu0 0
    %229 = vmatpush1.bf16.msra.mxu0 %v208
    %230 = vmatprep.subr.bf16.mxu0 0
    %231 = vmatpush1.bf16.msra.mxu0 %v209
    %232 = vmatprep.subr.bf16.mxu0 0
    %233 = vmatpush1.bf16.msra.mxu0 %v210
    %234 = vmatprep.subr.bf16.mxu0 0
    %235 = vmatpush1.bf16.msra.mxu0 %v211
    %236 = vmatprep.subr.bf16.mxu0 0
    %237 = vmatpush1.bf16.msra.mxu0 0
    %238 = vmatprep.subr.bf16.mxu0 0
    %239 = vmatpush1.bf16.msra.mxu0 0
    %240 = vmatprep.subr.bf16.mxu0 0
    %241 = vmatpush1.bf16.msra.mxu0 0
    %242 = vmatprep.subr.bf16.mxu0 0
    %243 = vmatpush1.bf16.msra.mxu0 0
    %244 = vmatprep.subr.bf16.mxu0 0
    %245 = vmatpush1.bf16.msra.mxu0 0
    %246 = vmatprep.subr.bf16.mxu0 0
    %247 = vmatpush1.bf16.msra.mxu0 0
    %248 = vmatprep.subr.bf16.mxu0 0
    %249 = vmatpush1.bf16.msra.mxu0 0
    %250 = vmatprep.subr.bf16.mxu0 0
    %251 = vmatpush1.bf16.msra.mxu0 0
    %252 = vmatprep.mubr.bf16.mxu0 0
    %253 = vmatmul.mubr.bf16.gmra.mrb[0].mxu0 %v93
    %v254 = vpop.f32.mrb[0].mxu0
    %v255 = vadd.f32 %v167, %v254
    %v256 = vpop.f32.mrb[0].mxu0
    %v257 = vpop.f32.mrb[0].mxu0
    %v258 = vpop.f32.mrb[0].mxu0
    %259 = vdwg.mxu0
    %v260 = vld [vmem:[%s4] sm:$0x1]
    %v262 = vlaneseq
    %v263 = vshrl.u32 %v262, 7
    %v264 = vsub.s32 0, %v263
    %v265 = vrot.slane %v260, %v264
    %v267 = vadd.f32 %v255, %v265
    %v268 = vmax.f32 %v267, 0.0
    %v269 = vpack.c.bf16 %v268, %v268
    %v270 = vld [vmem:[#allocation10] sm:$0xff]
    %v271 = vld [vmem:[#allocation10 + $0x8] sm:$0xff]
    %v272 = vld [vmem:[#allocation10 + $0x10] sm:$0xff]
    %v273 = vld [vmem:[#allocation10 + $0x18] sm:$0xff]
    %v274 = vld [vmem:[#allocation10 + $0x20] sm:$0xff]
    %v275 = vld [vmem:[#allocation10 + $0x28] sm:$0xff]
    %v276 = vld [vmem:[#allocation10 + $0x30] sm:$0xff]
    %v277 = vld [vmem:[#allocation10 + $0x38] sm:$0xff]
    %v278 = vld [vmem:[#allocation10 + $0x40] sm:$0xff]
    %v279 = vld [vmem:[#allocation10 + $0x48] sm:$0xff]
    %v280 = vld [vmem:[#allocation10 + $0x50] sm:$0xff]
    %v281 = vld [vmem:[#allocation10 + $0x58] sm:$0xff]
    %v282 = vld [vmem:[#allocation10 + $0x60] sm:$0xff]
    %v283 = vld [vmem:[#allocation10 + $0x68] sm:$0xff]
    %v284 = vld [vmem:[#allocation10 + $0x70] sm:$0xff]
    %v285 = vld [vmem:[#allocation10 + $0x78] sm:$0xff]
    %v286 = vld [vmem:[#allocation10 + $0x80] sm:$0xff]
    %v287 = vld [vmem:[#allocation10 + $0x88] sm:$0xff]
    %v288 = vld [vmem:[#allocation10 + $0x90] sm:$0xff]
    %v289 = vld [vmem:[#allocation10 + $0x98] sm:$0xff]
    %v290 = vld [vmem:[#allocation10 + $0xa0] sm:$0xff]
    %v291 = vld [vmem:[#allocation10 + $0xa8] sm:$0xff]
    %v292 = vld [vmem:[#allocation10 + $0xb0] sm:$0xff]
    %v293 = vld [vmem:[#allocation10 + $0xb8] sm:$0xff]
    %v294 = vld [vmem:[#allocation10 + $0xc0] sm:$0xff]
    %v295 = vld [vmem:[#allocation10 + $0xc8] sm:$0xff]
    %v296 = vld [vmem:[#allocation10 + $0xd0] sm:$0xff]
    %v297 = vld [vmem:[#allocation10 + $0xd8] sm:$0xff]
    %v298 = vld [vmem:[#allocation10 + $0xe0] sm:$0xff]
    %v299 = vld [vmem:[#allocation10 + $0xe8] sm:$0xff]
    %v300 = vld [vmem:[#allocation10 + $0xf0] sm:$0xff]
    %v301 = vld [vmem:[#allocation10 + $0xf8] sm:$0xff]
    %v302 = vld [vmem:[%s6] sm:$0xf]
    %v304 = vlaneseq
    %v305 = vshrl.u32 %v304, 7
    %v306 = vsub.s32 0, %v305
    %v307 = vrot.slane %v302, %v306
    %v308 = vlaneseq
    %v309 = vshrl.u32 %v308, 7
    %v310 = vsub.s32 1, %v309
    %v311 = vrot.slane %v302, %v310
    %v312 = vlaneseq
    %v313 = vshrl.u32 %v312, 7
    %v314 = vsub.s32 2, %v313
    %v315 = vrot.slane %v302, %v314
    %v316 = vlaneseq
    %v317 = vshrl.u32 %v316, 7
    %v318 = vsub.s32 3, %v317
    %v319 = vrot.slane %v302, %v318
    %v356 = vunpack.c.l.b16 %v270
    %v357 = vunpack.c.h.b16 %v270
    %v358 = vunpack.c.l.b16 %v271
    %v359 = vunpack.c.h.b16 %v271
    %v360 = vunpack.c.l.b16 %v272
    %v361 = vunpack.c.h.b16 %v272
    %v362 = vunpack.c.l.b16 %v273
    %v363 = vunpack.c.h.b16 %v273
    %v364 = vunpack.c.l.b16 %v274
    %v365 = vunpack.c.h.b16 %v274
    %v366 = vunpack.c.l.b16 %v275
    %v367 = vunpack.c.h.b16 %v275
    %v368 = vunpack.c.l.b16 %v276
    %v369 = vunpack.c.h.b16 %v276
    %v370 = vunpack.c.l.b16 %v277
    %v371 = vunpack.c.h.b16 %v277
    %v372 = vunpack.c.l.b16 %v278
    %v373 = vunpack.c.h.b16 %v278
    %v374 = vunpack.c.l.b16 %v279
    %v375 = vunpack.c.h.b16 %v279
    %v376 = vunpack.c.l.b16 %v280
    %v377 = vunpack.c.h.b16 %v280
    %v378 = vunpack.c.l.b16 %v281
    %v379 = vunpack.c.h.b16 %v281
    %v380 = vunpack.c.l.b16 %v282
    %v381 = vunpack.c.h.b16 %v282
    %v382 = vunpack.c.l.b16 %v283
    %v383 = vunpack.c.h.b16 %v283
    %v384 = vunpack.c.l.b16 %v284
    %v385 = vunpack.c.h.b16 %v284
    %v386 = vunpack.c.l.b16 %v285
    %v387 = vunpack.c.h.b16 %v285
    %v388 = vunpack.c.l.b16 %v286
    %v389 = vunpack.c.h.b16 %v286
    %v390 = vunpack.c.l.b16 %v287
    %v391 = vunpack.c.h.b16 %v287
    %v392 = vunpack.c.l.b16 %v288
    %v393 = vunpack.c.h.b16 %v288
    %v394 = vunpack.c.l.b16 %v289
    %v395 = vunpack.c.h.b16 %v289
    %v396 = vunpack.c.l.b16 %v290
    %v397 = vunpack.c.h.b16 %v290
    %v398 = vunpack.c.l.b16 %v291
    %v399 = vunpack.c.h.b16 %v291
    %v400 = vunpack.c.l.b16 %v292
    %v401 = vunpack.c.h.b16 %v292
    %v402 = vunpack.c.l.b16 %v293
    %v403 = vunpack.c.h.b16 %v293
    %v404 = vunpack.c.l.b16 %v294
    %v405 = vunpack.c.h.b16 %v294
    %v406 = vunpack.c.l.b16 %v295
    %v407 = vunpack.c.h.b16 %v295
    %v408 = vunpack.c.l.b16 %v296
    %v409 = vunpack.c.h.b16 %v296
    %v410 = vunpack.c.l.b16 %v297
    %v411 = vunpack.c.h.b16 %v297
    %v412 = vunpack.c.l.b16 %v298
    %v413 = vunpack.c.h.b16 %v298
    %v414 = vunpack.c.l.b16 %v299
    %v415 = vunpack.c.h.b16 %v299
    %v416 = vunpack.c.l.b16 %v300
    %v417 = vunpack.c.h.b16 %v300
    %v418 = vunpack.c.l.b16 %v301
    %v419 = vunpack.c.h.b16 %v301
    %v420 = vpack.c.b16 %v360, %v356
    %v421 = vpack.c.b16 %v361, %v357
    %v422 = vpack.c.b16 %v362, %v358
    %v423 = vpack.c.b16 %v363, %v359
    %v424 = vpack.c.b16 %v368, %v364
    %v425 = vpack.c.b16 %v369, %v365
    %v426 = vpack.c.b16 %v370, %v366
    %v427 = vpack.c.b16 %v371, %v367
    %v428 = vpack.c.b16 %v376, %v372
    %v429 = vpack.c.b16 %v377, %v373
    %v430 = vpack.c.b16 %v378, %v374
    %v431 = vpack.c.b16 %v379, %v375
    %v432 = vpack.c.b16 %v384, %v380
    %v433 = vpack.c.b16 %v385, %v381
    %v434 = vpack.c.b16 %v386, %v382
    %v435 = vpack.c.b16 %v387, %v383
    %v436 = vpack.c.b16 %v392, %v388
    %v437 = vpack.c.b16 %v393, %v389
    %v438 = vpack.c.b16 %v394, %v390
    %v439 = vpack.c.b16 %v395, %v391
    %v440 = vpack.c.b16 %v400, %v396
    %v441 = vpack.c.b16 %v401, %v397
    %v442 = vpack.c.b16 %v402, %v398
    %v443 = vpack.c.b16 %v403, %v399
    %v444 = vpack.c.b16 %v408, %v404
    %v445 = vpack.c.b16 %v409, %v405
    %v446 = vpack.c.b16 %v410, %v406
    %v447 = vpack.c.b16 %v411, %v407
    %v448 = vpack.c.b16 %v416, %v412
    %v449 = vpack.c.b16 %v417, %v413
    %v450 = vpack.c.b16 %v418, %v414
    %v451 = vpack.c.b16 %v419, %v415
    %484 = vmatprep.subr.bf16.mxu0 %v421
    %485 = vmatpush1.bf16.msra.mxu0 %v420
    %486 = vmatprep.subr.bf16.mxu0 %v425
    %487 = vmatpush1.bf16.msra.mxu0 %v424
    %488 = vmatprep.subr.bf16.mxu0 %v429
    %489 = vmatpush1.bf16.msra.mxu0 %v428
    %490 = vmatprep.subr.bf16.mxu0 %v433
    %491 = vmatpush1.bf16.msra.mxu0 %v432
    %492 = vmatprep.subr.bf16.mxu0 %v437
    %493 = vmatpush1.bf16.msra.mxu0 %v436
    %494 = vmatprep.subr.bf16.mxu0 %v441
    %495 = vmatpush1.bf16.msra.mxu0 %v440
    %496 = vmatprep.subr.bf16.mxu0 %v445
    %497 = vmatpush1.bf16.msra.mxu0 %v444
    %498 = vmatprep.subr.bf16.mxu0 %v449
    %499 = vmatpush1.bf16.msra.mxu0 %v448
    %500 = vmatprep.subr.bf16.mxu0 0
    %501 = vmatpush1.bf16.msra.mxu0 0
    %502 = vmatprep.subr.bf16.mxu0 0
    %503 = vmatpush1.bf16.msra.mxu0 0
    %504 = vmatprep.subr.bf16.mxu0 0
    %505 = vmatpush1.bf16.msra.mxu0 0
    %506 = vmatprep.subr.bf16.mxu0 0
    %507 = vmatpush1.bf16.msra.mxu0 0
    %508 = vmatprep.subr.bf16.mxu0 0
    %509 = vmatpush1.bf16.msra.mxu0 0
    %510 = vmatprep.subr.bf16.mxu0 0
    %511 = vmatpush1.bf16.msra.mxu0 0
    %512 = vmatprep.subr.bf16.mxu0 0
    %513 = vmatpush1.bf16.msra.mxu0 0
    %514 = vmatprep.subr.bf16.mxu0 0
    %515 = vmatpush1.bf16.msra.mxu0 0
    %516 = vmatprep.mubr.bf16.mxu0 0
    %517 = vmatmul.mubr.bf16.gmra.mrb[0].mxu0 %v269
    %v518 = vpop.f32.mrb[0].mxu0
    %v519 = vadd.f32 %v307, %v518
    %v520 = vpop.f32.mrb[0].mxu0
    %v521 = vadd.f32 %v311, %v520
    %v522 = vpop.f32.mrb[0].mxu0
    %v523 = vpop.f32.mrb[0].mxu0
    %524 = vdwg.mxu0
    %525 = vmatprep.subr.bf16.mxu0 %v423
    %526 = vmatpush1.bf16.msra.mxu0 %v422
    %527 = vmatprep.subr.bf16.mxu0 %v427
    %528 = vmatpush1.bf16.msra.mxu0 %v426
    %529 = vmatprep.subr.bf16.mxu0 %v431
    %530 = vmatpush1.bf16.msra.mxu0 %v430
    %531 = vmatprep.subr.bf16.mxu0 %v435
    %532 = vmatpush1.bf16.msra.mxu0 %v434
    %533 = vmatprep.subr.bf16.mxu0 %v439
    %534 = vmatpush1.bf16.msra.mxu0 %v438
    %535 = vmatprep.subr.bf16.mxu0 %v443
    %536 = vmatpush1.bf16.msra.mxu0 %v442
    %537 = vmatprep.subr.bf16.mxu0 %v447
    %538 = vmatpush1.bf16.msra.mxu0 %v446
    %539 = vmatprep.subr.bf16.mxu0 %v451
    %540 = vmatpush1.bf16.msra.mxu0 %v450
    %541 = vmatprep.subr.bf16.mxu0 0
    %542 = vmatpush1.bf16.msra.mxu0 0
    %543 = vmatprep.subr.bf16.mxu0 0
    %544 = vmatpush1.bf16.msra.mxu0 0
    %545 = vmatprep.subr.bf16.mxu0 0
    %546 = vmatpush1.bf16.msra.mxu0 0
    %547 = vmatprep.subr.bf16.mxu0 0
    %548 = vmatpush1.bf16.msra.mxu0 0
    %549 = vmatprep.subr.bf16.mxu0 0
    %550 = vmatpush1.bf16.msra.mxu0 0
    %551 = vmatprep.subr.bf16.mxu0 0
    %552 = vmatpush1.bf16.msra.mxu0 0
    %553 = vmatprep.subr.bf16.mxu0 0
    %554 = vmatpush1.bf16.msra.mxu0 0
    %555 = vmatprep.subr.bf16.mxu0 0
    %556 = vmatpush1.bf16.msra.mxu0 0
    %557 = vmatprep.mubr.bf16.mxu0 0
    %558 = vmatmul.mubr.bf16.gmra.mrb[0].mxu0 %v269
    %v559 = vpop.f32.mrb[0].mxu0
    %v560 = vadd.f32 %v315, %v559
    %v561 = vpop.f32.mrb[0].mxu0
    %v562 = vadd.f32 %v319, %v561
    %v563 = vpop.f32.mrb[0].mxu0
    %v564 = vpop.f32.mrb[0].mxu0
    %565 = vdwg.mxu0
    %v566 = vpack.c.bf16 %v519, %v519
    %v567 = vpack.c.bf16 %v521, %v521
    %v568 = vpack.c.bf16 %v560, %v560
    %v569 = vpack.c.bf16 %v562, %v562
    %v574 = vunpack.c.l.b16 %v566
    %v575 = vunpack.c.l.b16 %v567
    %v576 = vunpack.c.l.b16 %v568
    %v577 = vunpack.c.l.b16 %v569
    %v578 = vpack.c.b16 %v575, %v574
    %v579 = vpack.c.b16 %v577, %v576
    %582 = vst [vmem:[#allocation11] sm:$0xff] %v578
    %583 = vst [vmem:[#allocation11 + $0x8] sm:$0xff] %v579
    // Predicated region
    $region50: #{tpu_custom_call.1} parent=1 // pred_check
      _
    $region51: #{tpu_custom_call.1} parent=1 // pred_check_branch
      %585 = sbr.rel (0) target = $region53
    $region52: #{tpu_custom_call.1} parent=1 // pred_region
      %s587 = ssub.s32 256, 256
      %588 = vsyncadd [#allocation4], %s587
      %s590 = sshll.u32 [#allocation11], 4
      %s591 = int_to_ptr.vmem [resolvable:$true] %s590
      %593 = dma.vmem_to_hbm [thread:$0]  %s591, 256, %s7, [#allocation4]
    $region53: #{tpu_custom_call.1} parent=1 // pred_fallthru
      _
    // Predicated region
    $region54: #{tpu_custom_call.1} parent=1 // pred_check
      _
    $region55: #{tpu_custom_call.1} parent=1 // pred_check_branch
      %595 = sbr.rel (0) target = $region57
    $region56: #{tpu_custom_call.1} parent=1 // pred_region
      %596 = dma.done [#allocation4], 256
    $region57: #{tpu_custom_call.1} parent=1 // pred_fallthru
      _
    %597 = vsyncpa [#allocation3], 1
    %598 = vsyncpa [#allocation6], 1
    %599 = vsyncpa [#allocation9], 1
    %600 = vsyncpa [#allocation4], 1

</llo_original>
